<compile_context>
chip_gen: v7x
topology: tpu7x:2x2x1
jax: 0.10.0
libtpu: 0.0.40
codegen_flags: <defaults>
</compile_context>

<pallas_src>
import functools

import jax
import jax.numpy as jnp
from jax.experimental import pallas as pl
from jax.experimental.pallas import tpu as pltpu


def _round_up(x, m):
    return ((x + m - 1) // m) * m


# ---------------------------------------------------------------------------
# Pallas kernel: fused vocab projection + splade_max
# ---------------------------------------------------------------------------
def _splade_max_kernel(h_ref, w_ref, b_ref, m_ref, o_ref, *, batch, seq):
    """One grid step handles one vocab tile for ALL batch rows.

    h_ref: (B*Lp, H)  bf16 hidden, fully VMEM-resident (constant index_map)
    w_ref: (H, tv)    bf16 vocab-projection tile (streamed from HBM)
    b_ref: (1, tv)    f32 bias tile
    m_ref: (B*Lp, 1)  f32 attention mask (0/1), fully VMEM-resident
    o_ref: (B, tv)    f32 output tile (lane-dense, single full-block store)
    """
    # One fused (B*Lp, H) @ (H, tv) MXU matmul, f32 accumulation.
    logits = jnp.dot(h_ref[...], w_ref[...], preferred_element_type=jnp.float32)
    # relu + bias + mask in f32 (mask rows contribute exactly 0).
    vals = jnp.maximum(logits + b_ref[...], 0.0) * m_ref[...]        # (B*Lp, tv)
    tv = vals.shape[-1]
    # Max over the (padded) sequence axis; padded/masked rows are 0 >= nothing
    # positive is lost because every contribution is >= 0.
    acc = jnp.max(vals.reshape(batch, seq, tv), axis=1)               # (B, tv)
    # log1p applied once per reduced element (monotone on [0, inf), mask in
    # {0,1}) -> exactly equal to max(log1p(relu(x)) * mask).
    o_ref[...] = jnp.log1p(acc)


def splade_max_pallas(hidden, w_vocab, b_vocab, attention_mask, *, tv=None,
                      compute_dtype=jnp.bfloat16):
    """hidden: (B, L, H), w_vocab: (H, V), b_vocab: (V,), attention_mask: (B, L).
    Returns (B, V) float32 SPLADE representations."""
    B, L, H = hidden.shape
    V = w_vocab.shape[1]

    # Pad L to a multiple of 8 (sublane) so the in-kernel reshape is free;
    # padded rows get mask=0 and contribute exactly 0 to the non-negative max.
    Lp = max(8, _round_up(L, 8))

    # Generation-aware VMEM capacity (128 MiB on v5e/v6e, 64 MiB per-TC on v7x).
    try:
        vmem_cap = int(pltpu.get_tpu_info().vmem_capacity_bytes)
    except Exception:
        vmem_cap = 64 * 1024 * 1024   # conservative: valid on every generation

    itemsize = jnp.dtype(compute_dtype).itemsize
    # Resident inputs (double-buffered by default): bf16 hidden + f32 mask.
    resident = 2 * (B * Lp * H * itemsize) + 2 * (B * Lp * 4)

    def _tile_bytes(t):
        per_tile = 2 * (H * t * itemsize) + 2 * (t * 4) + 2 * (B * t * 4)
        live = 2 * (B * Lp * t * 4)   # logits + masked vals, f32, one copy each
        return per_tile + live

    if tv is None:
        budget = int(0.75 * vmem_cap)
        # Multiples of 256 (v6e/v7x MXU is 2x256x256); 128 only as last resort.
        cands = [c for c in (2048, 1024, 512, 256, 128) if c <= V]
        if not cands:
            cands = [_round_up(V, 128)]
        tv = cands[-1]
        for c in cands:
            if resident + _tile_bytes(c) <= budget:
                tv = c
                break

    Vp = _round_up(V, tv)
    n_tiles = Vp // tv
    if n_tiles > 1 and n_tiles % 2 == 1:
        # Even tile count so the "parallel" vocab axis shards evenly across
        # the two TensorCores on v7x.
        Vp += tv
        n_tiles += 1

    # Cast only if the caller did not already hand us bf16 (weights should be
    # stored persistently in bf16 -> no per-call H*V cast traffic).
    h = hidden if hidden.dtype == compute_dtype else hidden.astype(compute_dtype)
    w = w_vocab if w_vocab.dtype == compute_dtype else w_vocab.astype(compute_dtype)
    mask = attention_mask.astype(jnp.float32)

    if Lp != L:
        h = jnp.pad(h, ((0, 0), (0, Lp - L), (0, 0)))
        mask = jnp.pad(mask, ((0, 0), (0, Lp - L)))
    h_flat = h.reshape(B * Lp, H)
    m_flat = mask.reshape(B * Lp, 1)

    bias = b_vocab.astype(jnp.float32)
    if Vp != V:
        w = jnp.pad(w, ((0, 0), (0, Vp - V)))
        bias = jnp.pad(bias, ((0, Vp - V),))
    bias2d = bias.reshape(1, Vp)

    vmem_limit = int(min(vmem_cap,
                         max(32 * 1024 * 1024,
                             int(1.25 * (resident + _tile_bytes(tv))))))

    cost = pl.CostEstimate(
        flops=2 * B * Lp * H * Vp,
        transcendentals=B * Vp,                       # log1p post-reduction
        bytes_accessed=(B * Lp * H * itemsize + H * Vp * itemsize
                        + Vp * 4 + B * Lp * 4 + B * Vp * 4),
    )

    kernel = functools.partial(_splade_max_kernel, batch=B, seq=Lp)

    out = pl.pallas_call(
        kernel,
        out_shape=jax.ShapeDtypeStruct((B, Vp), jnp.float32),
        grid_spec=pltpu.PrefetchScalarGridSpec(
            num_scalar_prefetch=0,
            grid=(n_tiles,),
            in_specs=[
                pl.BlockSpec((B * Lp, H), lambda v: (0, 0)),   # hidden (resident)
                pl.BlockSpec((H, tv), lambda v: (0, v)),       # W_vocab tile (streamed)
                pl.BlockSpec((1, tv), lambda v: (0, v)),       # bias tile
                pl.BlockSpec((B * Lp, 1), lambda v: (0, 0)),   # mask (resident)
            ],
            out_specs=pl.BlockSpec((B, tv), lambda v: (0, v)),
        ),
        compiler_params=pltpu.CompilerParams(
            dimension_semantics=("parallel",),
            vmem_limit_bytes=vmem_limit,
        ),
        cost_estimate=cost,
    )(h_flat, w, bias2d, m_flat)

    return out if Vp == V else out[:, :V]


# ---------------------------------------------------------------------------
# Synthetic "masked LM encoder" body (plain-JAX glue producing hidden states)
# ---------------------------------------------------------------------------
def init_params(key, vocab_size, hidden):
    k1, k2, k3, k4, k5 = jax.random.split(key, 5)
    scale = 0.05
    return {
        "embed": jax.random.normal(k1, (vocab_size, hidden), jnp.float32) * scale,
        "w1": jax.random.normal(k2, (hidden, hidden), jnp.float32) * scale,
        "b1": jax.random.normal(k3, (hidden,), jnp.float32) * scale,
        # MLM-head projection stored persistently in bf16 (MXU-native, halves
        # weight HBM bytes, avoids a per-call f32->bf16 cast of H*V elements).
        "w_vocab": (jax.random.normal(k4, (hidden, vocab_size), jnp.float32)
                    * scale).astype(jnp.bfloat16),
        "b_vocab": jax.random.normal(k5, (vocab_size,), jnp.float32) * scale,
    }


def encoder_hidden(params, input_ids):
    x = params["embed"][input_ids]                          # (B, L, H) f32
    h = jax.nn.gelu(x @ params["w1"] + params["b1"])        # (B, L, H) f32
    return h.astype(jnp.bfloat16)                           # bf16 straight into the kernel


# ---------------------------------------------------------------------------
# SPLADE forward (shared_weights=True, splade_doc=False)
# ---------------------------------------------------------------------------
def splade_forward(params, input_ids, attention_mask, n_negatives):
    """input_ids / attention_mask: (B, L) where B = n_groups * (n_negatives + 2).
    Returns (queries_result, docs_result):
      queries_result: (n_groups, 1, V),  docs_result: (n_groups, n_negatives + 1, V)."""
    hidden = encoder_hidden(params, input_ids)                       # (B, L, H) bf16
    reps = splade_max_pallas(
        hidden, params["w_vocab"], params["b_vocab"],
        attention_mask.astype(jnp.float32),
    )                                                                # (B, V) f32
    V = reps.shape[1]
    output = reps.reshape(-1, n_negatives + 2, V)
    queries_result = output[:, :1, :]
    docs_result = output[:, 1:, :]
    return queries_result, docs_result


# ---------------------------------------------------------------------------
# Pure-JAX reference of splade_max (for correctness check)
# ---------------------------------------------------------------------------
def splade_max_ref(hidden, w_vocab, b_vocab, attention_mask):
    logits = hidden @ w_vocab + b_vocab                              # (B, L, V)
    vals = jnp.log1p(jnp.maximum(logits, 0.0)) * attention_mask[..., None]
    return jnp.max(vals, axis=1)                                     # (B, V)


if __name__ == "__main__":
    VOCAB = 256       # "output_dim" / vocab size of the MLM head
    HIDDEN = 32
    SEQ = 16
    N_NEG = 1         # n_negatives -> groups of (query, positive, negative) = 3
    N_GROUPS = 2
    B = N_GROUPS * (N_NEG + 2)   # 6

    key = jax.random.PRNGKey(0)
    kp, ki, km = jax.random.split(key, 3)

    params = init_params(kp, VOCAB, HIDDEN)

    input_ids = jax.random.randint(ki, (B, SEQ), 0, VOCAB, dtype=jnp.int32)
    # attention mask: ones with a few trailing pad positions masked out
    lengths = jax.random.randint(km, (B,), SEQ // 2, SEQ + 1)
    attention_mask = (jnp.arange(SEQ)[None, :] < lengths[:, None]).astype(jnp.float32)

    queries_result, docs_result = splade_forward(params, input_ids, attention_mask, N_NEG)
    jax.block_until_ready((queries_result, docs_result))

    # Correctness check against a pure-JAX f32 reference evaluated on the same
    # bf16-rounded hidden/weights (kernel accumulates in f32).
    hidden_f32 = encoder_hidden(params, input_ids).astype(jnp.float32)
    w_f32 = params["w_vocab"].astype(jnp.float32)
    reps_ref = splade_max_ref(hidden_f32, w_f32, params["b_vocab"], attention_mask)
    out_ref = reps_ref.reshape(-1, N_NEG + 2, VOCAB)
    q_ref, d_ref = out_ref[:, :1, :], out_ref[:, 1:, :]

    assert queries_result.shape == (N_GROUPS, 1, VOCAB)
    assert docs_result.shape == (N_GROUPS, N_NEG + 1, VOCAB)
    assert jnp.allclose(queries_result, q_ref, atol=1e-2, rtol=1e-2)
    assert jnp.allclose(docs_result, d_ref, atol=1e-2, rtol=1e-2)

    print("KERNEL_OK")
</pallas_src>

<mosaic_0001>
module attributes {stable_mosaic.version = 11 : i64} {
  func.func @_splade_max_kernel(%arg0: i32, %arg1: memref<96x32xbf16, #tpu.memory_space<vmem>>, %arg2: memref<32x256xbf16, #tpu.memory_space<vmem>>, %arg3: memref<1x256xf32, #tpu.memory_space<vmem>>, %arg4: memref<96x1xf32, #tpu.memory_space<vmem>>, %arg5: memref<6x256xf32, #tpu.memory_space<vmem>>) attributes {dimension_semantics = [#tpu.dimension_semantics<parallel>], iteration_bounds = array<i64: 1>, scalar_prefetch = 0 : i64, scratch_operands = 0 : i64, tpu.core_type = #tpu.core_type<tc>, window_params = [{pipeline_mode = #tpu.pipeline_mode<synchronous>, transform_indices = @transform_0, window_bounds = array<i64: 96, 32>}, {transform_indices = @transform_1, window_bounds = array<i64: 32, 256>}, {transform_indices = @transform_2, window_bounds = array<i64: 1, 256>}, {pipeline_mode = #tpu.pipeline_mode<synchronous>, transform_indices = @transform_3, window_bounds = array<i64: 96, 1>}, {transform_indices = @transform_4, window_bounds = array<i64: 6, 256>}]} {
    %c0 = arith.constant 0 : index
    %c0_0 = arith.constant 0 : index
    %0 = vector.load %arg1[%c0, %c0_0] : memref<96x32xbf16, #tpu.memory_space<vmem>>, vector<96x32xbf16>
    %c0_1 = arith.constant 0 : index
    %c0_2 = arith.constant 0 : index
    %1 = vector.load %arg2[%c0_1, %c0_2] : memref<32x256xbf16, #tpu.memory_space<vmem>>, vector<32x256xbf16>
    %cst = arith.constant dense<0.000000e+00> : vector<96x256xf32>
    %2 = tpu.matmul %0, %1, %cst {dimension_numbers = #tpu.dot_dimension_numbers<[1], [0], [0], [1], [0, 0, 1, 1], [], []>} : vector<96x32xbf16>, vector<32x256xbf16>, vector<96x256xf32> -> vector<96x256xf32>
    %c0_3 = arith.constant 0 : index
    %c0_4 = arith.constant 0 : index
    %3 = vector.load %arg3[%c0_3, %c0_4] : memref<1x256xf32, #tpu.memory_space<vmem>>, vector<1x256xf32>
    %4 = vector.broadcast %3 : vector<1x256xf32> to vector<96x256xf32>
    %5 = arith.addf %2, %4 : vector<96x256xf32>
    %cst_5 = arith.constant 0.000000e+00 : f32
    %6 = vector.broadcast %cst_5 : f32 to vector<96x256xf32>
    %7 = arith.maximumf %5, %6 : vector<96x256xf32>
    %c0_6 = arith.constant 0 : index
    %c0_7 = arith.constant 0 : index
    %8 = vector.load %arg4[%c0_6, %c0_7] : memref<96x1xf32, #tpu.memory_space<vmem>>, vector<96x1xf32>
    %9 = vector.broadcast %8 : vector<96x1xf32> to vector<96x256xf32>
    %10 = arith.mulf %7, %9 : vector<96x256xf32>
    %11 = vector.shape_cast %10 : vector<96x256xf32> to vector<6x16x256xf32>
    %cst_8 = arith.constant dense<0xFF800000> : vector<6x256xf32>
    %12 = vector.multi_reduction <maximumf>, %11, %cst_8 [1] : vector<6x16x256xf32> to vector<6x256xf32>
    %13 = math.log1p %12 : vector<6x256xf32>
    %c0_9 = arith.constant 0 : index
    %c0_10 = arith.constant 0 : index
    %14 = vector.load %arg5[%c0_9, %c0_10] : memref<6x256xf32, #tpu.memory_space<vmem>>, vector<6x256xf32>
    tpu.vector_store %arg5[%c0_9, %c0_10], %13 {strides = array<i32>} : memref<6x256xf32, #tpu.memory_space<vmem>>, vector<6x256xf32>,
    return
  }
  func.func @transform_0(%arg0: i32) -> (i32, i32) {
    %c0_i32 = arith.constant 0 : i32
    %c0_i32_0 = arith.constant 0 : i32
    %c0_i32_1 = arith.constant 0 : i32
    return %c0_i32, %c0_i32_0 : i32, i32
  }
  func.func @transform_1(%arg0: i32) -> (i32, i32) {
    %c0_i32 = arith.constant 0 : i32
    %c0_i32_0 = arith.constant 0 : i32
    return %c0_i32, %arg0 : i32, i32
  }
  func.func @transform_2(%arg0: i32) -> (i32, i32) {
    %c0_i32 = arith.constant 0 : i32
    %c0_i32_0 = arith.constant 0 : i32
    return %c0_i32, %arg0 : i32, i32
  }
  func.func @transform_3(%arg0: i32) -> (i32, i32) {
    %c0_i32 = arith.constant 0 : i32
    %c0_i32_0 = arith.constant 0 : i32
    %c0_i32_1 = arith.constant 0 : i32
    return %c0_i32, %c0_i32_0 : i32, i32
  }
  func.func @transform_4(%arg0: i32) -> (i32, i32) {
    %c0_i32 = arith.constant 0 : i32
    %c0_i32_0 = arith.constant 0 : i32
    return %c0_i32, %arg0 : i32, i32
  }
}

</mosaic_0001>

<llo_original>
// kernel: tpu_custom_call.1
$region0: #{tpu_custom_call.1}
  #allocation0 [shape = 'u32[]', space=smem, size = 0x4, offset = 0x4, fixed_abs, tag = 'smem constant byte address 0x4 - core index']
  #allocation1 [shape = 'u32[144,128]{1,0:T(1,128)}', space=vmem, size = 0x12000, scoped, tag = 'internal scratch']
  %s0 = inlined_call_operand.vmem [shape: bf16[96,32], index: 0, kind: input, shape index: {}]
  %s1 = inlined_call_operand.vmem [shape: bf16[32,256], index: 1, kind: input, shape index: {}]
  %s2 = inlined_call_operand.vmem [shape: f32[1,256], index: 2, kind: input, shape index: {}]
  %s3 = inlined_call_operand.vmem [shape: f32[96,1], index: 3, kind: input, shape index: {}]
  %s4 = inlined_call_operand.hbm [shape: f32[6,256], index: 4, kind: output, shape index: {}]
  %s5 = sld [smem:[#allocation0]]
  $region26: #{tpu_custom_call.1} parent=0
    _
  %s7 = ssub.s32 1, %s5
  %s8 = scalar_select 0, %s7, %s5
  $region1: #{tpu_custom_call.1} parent=0
    #allocation2 [shape = 'u8[8192]{0}', space=vmem, size = 0x2000, scoped, tag = 'output window, operand 0, single buffered']
    #allocation3 [shape = 's32[1]{0}', space=sflag, size = 0x4, scoped, tag = 'scoped memory for tpu_custom_call.1']
    %9 = vsyncpa [#allocation3], 0
    // Predicated region
    $region2: #{tpu_custom_call.1} parent=1 // pred_check
      _
    $region3: #{tpu_custom_call.1} parent=1 // pred_check_branch
      %11 = sbr.rel (0) target = $region5
    $region4: #{tpu_custom_call.1} parent=1 // pred_region
      _
    $region5: #{tpu_custom_call.1} parent=1 // pred_fallthru
      _
    // Predicated region
    $region6: #{tpu_custom_call.1} parent=1 // pred_check
      _
    $region7: #{tpu_custom_call.1} parent=1 // pred_check_branch
      %13 = sbr.rel (0) target = $region9
    $region8: #{tpu_custom_call.1} parent=1 // pred_region
      _
    $region9: #{tpu_custom_call.1} parent=1 // pred_fallthru
      _
    // Predicated region
    $region10: #{tpu_custom_call.1} parent=1 // pred_check
      _
    $region11: #{tpu_custom_call.1} parent=1 // pred_check_branch
      %15 = sbr.rel (0) target = $region13
    $region12: #{tpu_custom_call.1} parent=1 // pred_region
      _
    $region13: #{tpu_custom_call.1} parent=1 // pred_fallthru
      _
    // Predicated region
    $region14: #{tpu_custom_call.1} parent=1 // pred_check
      _
    $region15: #{tpu_custom_call.1} parent=1 // pred_check_branch
      %17 = sbr.rel (0) target = $region17
    $region16: #{tpu_custom_call.1} parent=1 // pred_region
      _
    $region17: #{tpu_custom_call.1} parent=1 // pred_fallthru
      _
    %v19 = vld [vmem:[%s0] sm:$0xf]
    %v20 = vld [vmem:[%s0 + $0x4] sm:$0xf]
    %v21 = vld [vmem:[%s0 + $0x8] sm:$0xf]
    %v22 = vld [vmem:[%s0 + $0xc] sm:$0xf]
    %v23 = vld [vmem:[%s0 + $0x10] sm:$0xf]
    %v24 = vld [vmem:[%s0 + $0x14] sm:$0xf]
    %v25 = vld [vmem:[%s0 + $0x18] sm:$0xf]
    %v26 = vld [vmem:[%s0 + $0x1c] sm:$0xf]
    %v27 = vld [vmem:[%s0 + $0x20] sm:$0xf]
    %v28 = vld [vmem:[%s0 + $0x24] sm:$0xf]
    %v29 = vld [vmem:[%s0 + $0x28] sm:$0xf]
    %v30 = vld [vmem:[%s0 + $0x2c] sm:$0xf]
    %v31 = vld [vmem:[%s1] sm:$0xff]
    %v32 = vld [vmem:[%s1 + $0x8] sm:$0xff]
    %v33 = vld [vmem:[%s1 + $0x10] sm:$0xff]
    %v34 = vld [vmem:[%s1 + $0x18] sm:$0xff]
    %v35 = vld [vmem:[%s2] sm:$0x3]
    %v37 = vlaneseq
    %v38 = vshrl.u32 %v37, 7
    %v39 = vsub.s32 0, %v38
    %v40 = vrot.slane %v35, %v39
    %v41 = vlaneseq
    %v42 = vshrl.u32 %v41, 7
    %v43 = vsub.s32 1, %v42
    %v44 = vrot.slane %v35, %v43
    %v59 = vunpack.c.l.b16 %v19
    %v60 = vunpack.c.l.b16 %v20
    %v61 = vunpack.c.l.b16 %v21
    %v62 = vunpack.c.l.b16 %v22
    %v63 = vunpack.c.l.b16 %v23
    %v64 = vunpack.c.l.b16 %v24
    %v65 = vunpack.c.l.b16 %v25
    %v66 = vunpack.c.l.b16 %v26
    %v67 = vunpack.c.l.b16 %v27
    %v68 = vunpack.c.l.b16 %v28
    %v69 = vunpack.c.l.b16 %v29
    %v70 = vunpack.c.l.b16 %v30
    %v71 = vpack.c.b16 %v60, %v59
    %v72 = vpack.c.b16 %v62, %v61
    %v73 = vpack.c.b16 %v64, %v63
    %v74 = vpack.c.b16 %v66, %v65
    %v75 = vpack.c.b16 %v68, %v67
    %v76 = vpack.c.b16 %v70, %v69
    %v81 = vunpack.c.l.b16 %v31
    %v82 = vunpack.c.h.b16 %v31
    %v83 = vunpack.c.l.b16 %v32
    %v84 = vunpack.c.h.b16 %v32
    %v85 = vunpack.c.l.b16 %v33
    %v86 = vunpack.c.h.b16 %v33
    %v87 = vunpack.c.l.b16 %v34
    %v88 = vunpack.c.h.b16 %v34
    %v89 = vpack.c.b16 %v83, %v81
    %v90 = vpack.c.b16 %v84, %v82
    %v91 = vpack.c.b16 %v87, %v85
    %v92 = vpack.c.b16 %v88, %v86
    %vm97 = vcmask 261120
    %v99 = vsel %vm97, %v71, 0
    %v102 = vsel %vm97, %v72, 0
    %v105 = vsel %vm97, %v73, 0
    %v108 = vsel %vm97, %v74, 0
    %v111 = vsel %vm97, %v75, 0
    %v114 = vsel %vm97, %v76, 0
    %116 = vmatprep.subr.bf16.mxu0 %v90
    %117 = vmatpush1.bf16.msra.mxu0 %v89
    %118 = vmatprep.subr.bf16.mxu0 %v92
    %119 = vmatpush1.bf16.msra.mxu0 %v91
    %120 = vmatprep.subr.bf16.mxu0 0
    %121 = vmatpush1.bf16.msra.mxu0 0
    %122 = vmatprep.subr.bf16.mxu0 0
    %123 = vmatpush1.bf16.msra.mxu0 0
    %124 = vmatprep.subr.bf16.mxu0 0
    %125 = vmatpush1.bf16.msra.mxu0 0
    %126 = vmatprep.subr.bf16.mxu0 0
    %127 = vmatpush1.bf16.msra.mxu0 0
    %128 = vmatprep.subr.bf16.mxu0 0
    %129 = vmatpush1.bf16.msra.mxu0 0
    %130 = vmatprep.subr.bf16.mxu0 0
    %131 = vmatpush1.bf16.msra.mxu0 0
    %132 = vmatprep.subr.bf16.mxu0 0
    %133 = vmatpush1.bf16.msra.mxu0 0
    %134 = vmatprep.subr.bf16.mxu0 0
    %135 = vmatpush1.bf16.msra.mxu0 0
    %136 = vmatprep.subr.bf16.mxu0 0
    %137 = vmatpush1.bf16.msra.mxu0 0
    %138 = vmatprep.subr.bf16.mxu0 0
    %139 = vmatpush1.bf16.msra.mxu0 0
    %140 = vmatprep.subr.bf16.mxu0 0
    %141 = vmatpush1.bf16.msra.mxu0 0
    %142 = vmatprep.subr.bf16.mxu0 0
    %143 = vmatpush1.bf16.msra.mxu0 0
    %144 = vmatprep.subr.bf16.mxu0 0
    %145 = vmatpush1.bf16.msra.mxu0 0
    %146 = vmatprep.subr.bf16.mxu0 0
    %147 = vmatpush1.bf16.msra.mxu0 0
    %148 = vmatprep.mubr.bf16.mxu0 0
    %149 = vmatmul.mubr.bf16.gmra.mrb[0].mxu0 %v99
    %v150 = vpop.f32.mrb[0].mxu0
    %v151 = vadd.f32 %v40, %v150
    %v152 = vpop.f32.mrb[0].mxu0
    %v153 = vadd.f32 %v44, %v152
    %v154 = vpop.f32.mrb[0].mxu0
    %v155 = vadd.f32 %v40, %v154
    %v156 = vpop.f32.mrb[0].mxu0
    %v157 = vadd.f32 %v44, %v156
    %158 = vmatprep.mubr.bf16.mxu0 0
    %159 = vmatmul.mubr.bf16.gmra.mrb[0].mxu0 %v102
    %v160 = vpop.f32.mrb[0].mxu0
    %v161 = vadd.f32 %v40, %v160
    %v162 = vpop.f32.mrb[0].mxu0
    %v163 = vadd.f32 %v44, %v162
    %v164 = vpop.f32.mrb[0].mxu0
    %v165 = vadd.f32 %v40, %v164
    %v166 = vpop.f32.mrb[0].mxu0
    %v167 = vadd.f32 %v44, %v166
    %168 = vmatprep.mubr.bf16.mxu0 0
    %169 = vmatmul.mubr.bf16.gmra.mrb[0].mxu0 %v105
    %v170 = vpop.f32.mrb[0].mxu0
    %v171 = vadd.f32 %v40, %v170
    %v172 = vpop.f32.mrb[0].mxu0
    %v173 = vadd.f32 %v44, %v172
    %v174 = vpop.f32.mrb[0].mxu0
    %v175 = vadd.f32 %v40, %v174
    %v176 = vpop.f32.mrb[0].mxu0
    %v177 = vadd.f32 %v44, %v176
    %178 = vmatprep.mubr.bf16.mxu0 0
    %179 = vmatmul.mubr.bf16.gmra.mrb[0].mxu0 %v108
    %v180 = vpop.f32.mrb[0].mxu0
    %v181 = vadd.f32 %v40, %v180
    %v182 = vpop.f32.mrb[0].mxu0
    %v183 = vadd.f32 %v44, %v182
    %v184 = vpop.f32.mrb[0].mxu0
    %v185 = vadd.f32 %v40, %v184
    %v186 = vpop.f32.mrb[0].mxu0
    %v187 = vadd.f32 %v44, %v186
    %188 = vmatprep.mubr.bf16.mxu0 0
    %189 = vmatmul.mubr.bf16.gmra.mrb[0].mxu0 %v111
    %v190 = vpop.f32.mrb[0].mxu0
    %v191 = vadd.f32 %v40, %v190
    %v192 = vpop.f32.mrb[0].mxu0
    %v193 = vadd.f32 %v44, %v192
    %v194 = vpop.f32.mrb[0].mxu0
    %v195 = vadd.f32 %v40, %v194
    %v196 = vpop.f32.mrb[0].mxu0
    %v197 = vadd.f32 %v44, %v196
    %198 = vmatprep.mubr.bf16.mxu0 0
    %199 = vmatmul.mubr.bf16.gmra.mrb[0].mxu0 %v114
    %v200 = vpop.f32.mrb[0].mxu0
    %v201 = vadd.f32 %v40, %v200
    %v202 = vpop.f32.mrb[0].mxu0
    %v203 = vadd.f32 %v44, %v202
    %v204 = vpop.f32.mrb[0].mxu0
    %v205 = vadd.f32 %v40, %v204
    %v206 = vpop.f32.mrb[0].mxu0
    %v207 = vadd.f32 %v44, %v206
    %208 = vdwg.mxu0
    %v209 = vmax.f32 %v151, 0.0
    %v210 = vmax.f32 %v153, 0.0
    %v211 = vmax.f32 %v155, 0.0
    %v212 = vmax.f32 %v157, 0.0
    %v213 = vmax.f32 %v161, 0.0
    %v214 = vmax.f32 %v163, 0.0
    %v215 = vmax.f32 %v165, 0.0
    %v216 = vmax.f32 %v167, 0.0
    %v217 = vmax.f32 %v171, 0.0
    %v218 = vmax.f32 %v173, 0.0
    %v219 = vmax.f32 %v175, 0.0
    %v220 = vmax.f32 %v177, 0.0
    %v221 = vmax.f32 %v181, 0.0
    %v222 = vmax.f32 %v183, 0.0
    %v223 = vmax.f32 %v185, 0.0
    %v224 = vmax.f32 %v187, 0.0
    %v225 = vmax.f32 %v191, 0.0
    %v226 = vmax.f32 %v193, 0.0
    %v227 = vmax.f32 %v195, 0.0
    %v228 = vmax.f32 %v197, 0.0
    %v229 = vmax.f32 %v201, 0.0
    %v230 = vmax.f32 %v203, 0.0
    %v231 = vmax.f32 %v205, 0.0
    %v232 = vmax.f32 %v207, 0.0
    %v233 = vld [vmem:[%s3] sm:$0xff]
    %v234 = vld [vmem:[%s3 + $0x8] sm:$0xff]
    %v235 = vld [vmem:[%s3 + $0x10] sm:$0xff]
    %v236 = vld [vmem:[%s3 + $0x18] sm:$0xff]
    %v237 = vld [vmem:[%s3 + $0x20] sm:$0xff]
    %v238 = vld [vmem:[%s3 + $0x28] sm:$0xff]
    %v239 = vld [vmem:[%s3 + $0x30] sm:$0xff]
    %v240 = vld [vmem:[%s3 + $0x38] sm:$0xff]
    %v241 = vld [vmem:[%s3 + $0x40] sm:$0xff]
    %v242 = vld [vmem:[%s3 + $0x48] sm:$0xff]
    %v243 = vld [vmem:[%s3 + $0x50] sm:$0xff]
    %v244 = vld [vmem:[%s3 + $0x58] sm:$0xff]
    %246 = vset.pattern.permute.xlu0 0
    %247 = vperm.xlu0 %246, %v233
    %v248 = vpop.permute.xlu0 %247
    %251 = vset.pattern.permute.xlu0 0
    %252 = vperm.xlu0 %251, %v234
    %v253 = vpop.permute.xlu0 %252
    %256 = vset.pattern.permute.xlu0 0
    %257 = vperm.xlu0 %256, %v235
    %v258 = vpop.permute.xlu0 %257
    %261 = vset.pattern.permute.xlu0 0
    %262 = vperm.xlu0 %261, %v236
    %v263 = vpop.permute.xlu0 %262
    %266 = vset.pattern.permute.xlu0 0
    %267 = vperm.xlu0 %266, %v237
    %v268 = vpop.permute.xlu0 %267
    %271 = vset.pattern.permute.xlu0 0
    %272 = vperm.xlu0 %271, %v238
    %v273 = vpop.permute.xlu0 %272
    %276 = vset.pattern.permute.xlu0 0
    %277 = vperm.xlu0 %276, %v239
    %v278 = vpop.permute.xlu0 %277
    %281 = vset.pattern.permute.xlu0 0
    %282 = vperm.xlu0 %281, %v240
    %v283 = vpop.permute.xlu0 %282
    %286 = vset.pattern.permute.xlu0 0
    %287 = vperm.xlu0 %286, %v241
    %v288 = vpop.permute.xlu0 %287
    %291 = vset.pattern.permute.xlu0 0
    %292 = vperm.xlu0 %291, %v242
    %v293 = vpop.permute.xlu0 %292
    %296 = vset.pattern.permute.xlu0 0
    %297 = vperm.xlu0 %296, %v243
    %v298 = vpop.permute.xlu0 %297
    %301 = vset.pattern.permute.xlu0 0
    %302 = vperm.xlu0 %301, %v244
    %v303 = vpop.permute.xlu0 %302
    %v305 = vmul.f32 %v209, %v248
    %v306 = vmul.f32 %v210, %v248
    %v307 = vmul.f32 %v211, %v253
    %v308 = vmul.f32 %v212, %v253
    %v309 = vmul.f32 %v213, %v258
    %v310 = vmul.f32 %v214, %v258
    %v311 = vmul.f32 %v215, %v263
    %v312 = vmul.f32 %v216, %v263
    %v313 = vmul.f32 %v217, %v268
    %v314 = vmul.f32 %v218, %v268
    %v315 = vmul.f32 %v219, %v273
    %v316 = vmul.f32 %v220, %v273
    %v317 = vmul.f32 %v221, %v278
    %v318 = vmul.f32 %v222, %v278
    %v319 = vmul.f32 %v223, %v283
    %v320 = vmul.f32 %v224, %v283
    %v321 = vmul.f32 %v225, %v288
    %v322 = vmul.f32 %v226, %v288
    %v323 = vmul.f32 %v227, %v293
    %v324 = vmul.f32 %v228, %v293
    %v325 = vmul.f32 %v229, %v298
    %v326 = vmul.f32 %v230, %v298
    %v327 = vmul.f32 %v231, %v303
    %v328 = vmul.f32 %v232, %v303
    %v329 = vmax.f32 %v305, %v307
    %v330 = vrot.slane %v329, 4
    %v331 = vmax.f32 %v329, %v330
    %v332 = vrot.slane %v331, 2
    %v333 = vmax.f32 %v331, %v332
    %v334 = vrot.slane %v333, 1
    %v335 = vmax.f32 %v333, %v334
    %v336 = vmax.f32 %v306, %v308
    %v337 = vrot.slane %v336, 4
    %v338 = vmax.f32 %v336, %v337
    %v339 = vrot.slane %v338, 2
    %v340 = vmax.f32 %v338, %v339
    %v341 = vrot.slane %v340, 1
    %v342 = vmax.f32 %v340, %v341
    %v343 = vmax.f32 %v309, %v311
    %v344 = vrot.slane %v343, 4
    %v345 = vmax.f32 %v343, %v344
    %v346 = vrot.slane %v345, 2
    %v347 = vmax.f32 %v345, %v346
    %v348 = vrot.slane %v347, 1
    %v349 = vmax.f32 %v347, %v348
    %v350 = vmax.f32 %v310, %v312
    %v351 = vrot.slane %v350, 4
    %v352 = vmax.f32 %v350, %v351
    %v353 = vrot.slane %v352, 2
    %v354 = vmax.f32 %v352, %v353
    %v355 = vrot.slane %v354, 1
    %v356 = vmax.f32 %v354, %v355
    %v357 = vmax.f32 %v313, %v315
    %v358 = vrot.slane %v357, 4
    %v359 = vmax.f32 %v357, %v358
    %v360 = vrot.slane %v359, 2
    %v361 = vmax.f32 %v359, %v360
    %v362 = vrot.slane %v361, 1
    %v363 = vmax.f32 %v361, %v362
    %v364 = vmax.f32 %v314, %v316
    %v365 = vrot.slane %v364, 4
    %v366 = vmax.f32 %v364, %v365
    %v367 = vrot.slane %v366, 2
    %v368 = vmax.f32 %v366, %v367
    %v369 = vrot.slane %v368, 1
    %v370 = vmax.f32 %v368, %v369
    %v371 = vmax.f32 %v317, %v319
    %v372 = vrot.slane %v371, 4
    %v373 = vmax.f32 %v371, %v372
    %v374 = vrot.slane %v373, 2
    %v375 = vmax.f32 %v373, %v374
    %v376 = vrot.slane %v375, 1
    %v377 = vmax.f32 %v375, %v376
    %v378 = vmax.f32 %v318, %v320
    %v379 = vrot.slane %v378, 4
    %v380 = vmax.f32 %v378, %v379
    %v381 = vrot.slane %v380, 2
    %v382 = vmax.f32 %v380, %v381
    %v383 = vrot.slane %v382, 1
    %v384 = vmax.f32 %v382, %v383
    %v385 = vmax.f32 %v321, %v323
    %v386 = vrot.slane %v385, 4
    %v387 = vmax.f32 %v385, %v386
    %v388 = vrot.slane %v387, 2
    %v389 = vmax.f32 %v387, %v388
    %v390 = vrot.slane %v389, 1
    %v391 = vmax.f32 %v389, %v390
    %v392 = vmax.f32 %v322, %v324
    %v393 = vrot.slane %v392, 4
    %v394 = vmax.f32 %v392, %v393
    %v395 = vrot.slane %v394, 2
    %v396 = vmax.f32 %v394, %v395
    %v397 = vrot.slane %v396, 1
    %v398 = vmax.f32 %v396, %v397
    %v399 = vmax.f32 %v325, %v327
    %v400 = vrot.slane %v399, 4
    %v401 = vmax.f32 %v399, %v400
    %v402 = vrot.slane %v401, 2
    %v403 = vmax.f32 %v401, %v402
    %v404 = vrot.slane %v403, 1
    %v405 = vmax.f32 %v403, %v404
    %v406 = vmax.f32 %v326, %v328
    %v407 = vrot.slane %v406, 4
    %v408 = vmax.f32 %v406, %v407
    %v409 = vrot.slane %v408, 2
    %v410 = vmax.f32 %v408, %v409
    %v411 = vrot.slane %v410, 1
    %v412 = vmax.f32 %v410, %v411
    %v413 = vadd.f32 %v335, 1.0
    %v414 = vlog2.pop %v413
    %v415 = vmul.f32 %v414, 0.6931472
    %v416 = vmul.f32 -0.5, %v335
    %v417 = vadd.f32 %v416, 1.0
    %v418 = vmul.f32 %v417, %v335
    %v419 = vand.u32 2147483647, %v335
    %vm420 = vcmp.lt.f32.partialorder %v419, 0.0004427343
    %v421 = vsel %vm420, %v418, %v415
    %v422 = vadd.f32 %v342, 1.0
    %v423 = vlog2.pop %v422
    %v424 = vmul.f32 %v423, 0.6931472
    %v425 = vmul.f32 -0.5, %v342
    %v426 = vadd.f32 %v425, 1.0
    %v427 = vmul.f32 %v426, %v342
    %v428 = vand.u32 2147483647, %v342
    %vm429 = vcmp.lt.f32.partialorder %v428, 0.0004427343
    %v430 = vsel %vm429, %v427, %v424
    %v431 = vadd.f32 %v349, 1.0
    %v432 = vlog2.pop %v431
    %v433 = vmul.f32 %v432, 0.6931472
    %v434 = vmul.f32 -0.5, %v349
    %v435 = vadd.f32 %v434, 1.0
    %v436 = vmul.f32 %v435, %v349
    %v437 = vand.u32 2147483647, %v349
    %vm438 = vcmp.lt.f32.partialorder %v437, 0.0004427343
    %v439 = vsel %vm438, %v436, %v433
    %v440 = vadd.f32 %v356, 1.0
    %v441 = vlog2.pop %v440
    %v442 = vmul.f32 %v441, 0.6931472
    %v443 = vmul.f32 -0.5, %v356
    %v444 = vadd.f32 %v443, 1.0
    %v445 = vmul.f32 %v444, %v356
    %v446 = vand.u32 2147483647, %v356
    %vm447 = vcmp.lt.f32.partialorder %v446, 0.0004427343
    %v448 = vsel %vm447, %v445, %v442
    %v449 = vadd.f32 %v363, 1.0
    %v450 = vlog2.pop %v449
    %v451 = vmul.f32 %v450, 0.6931472
    %v452 = vmul.f32 -0.5, %v363
    %v453 = vadd.f32 %v452, 1.0
    %v454 = vmul.f32 %v453, %v363
    %v455 = vand.u32 2147483647, %v363
    %vm456 = vcmp.lt.f32.partialorder %v455, 0.0004427343
    %v457 = vsel %vm456, %v454, %v451
    %v458 = vadd.f32 %v370, 1.0
    %v459 = vlog2.pop %v458
    %v460 = vmul.f32 %v459, 0.6931472
    %v461 = vmul.f32 -0.5, %v370
    %v462 = vadd.f32 %v461, 1.0
    %v463 = vmul.f32 %v462, %v370
    %v464 = vand.u32 2147483647, %v370
    %vm465 = vcmp.lt.f32.partialorder %v464, 0.0004427343
    %v466 = vsel %vm465, %v463, %v460
    %v467 = vadd.f32 %v377, 1.0
    %v468 = vlog2.pop %v467
    %v469 = vmul.f32 %v468, 0.6931472
    %v470 = vmul.f32 -0.5, %v377
    %v471 = vadd.f32 %v470, 1.0
    %v472 = vmul.f32 %v471, %v377
    %v473 = vand.u32 2147483647, %v377
    %vm474 = vcmp.lt.f32.partialorder %v473, 0.0004427343
    %v475 = vsel %vm474, %v472, %v469
    %v476 = vadd.f32 %v384, 1.0
    %v477 = vlog2.pop %v476
    %v478 = vmul.f32 %v477, 0.6931472
    %v479 = vmul.f32 -0.5, %v384
    %v480 = vadd.f32 %v479, 1.0
    %v481 = vmul.f32 %v480, %v384
    %v482 = vand.u32 2147483647, %v384
    %vm483 = vcmp.lt.f32.partialorder %v482, 0.0004427343
    %v484 = vsel %vm483, %v481, %v478
    %v485 = vadd.f32 %v391, 1.0
    %v486 = vlog2.pop %v485
    %v487 = vmul.f32 %v486, 0.6931472
    %v488 = vmul.f32 -0.5, %v391
    %v489 = vadd.f32 %v488, 1.0
    %v490 = vmul.f32 %v489, %v391
    %v491 = vand.u32 2147483647, %v391
    %vm492 = vcmp.lt.f32.partialorder %v491, 0.0004427343
    %v493 = vsel %vm492, %v490, %v487
    %v494 = vadd.f32 %v398, 1.0
    %v495 = vlog2.pop %v494
    %v496 = vmul.f32 %v495, 0.6931472
    %v497 = vmul.f32 -0.5, %v398
    %v498 = vadd.f32 %v497, 1.0
    %v499 = vmul.f32 %v498, %v398
    %v500 = vand.u32 2147483647, %v398
    %vm501 = vcmp.lt.f32.partialorder %v500, 0.0004427343
    %v502 = vsel %vm501, %v499, %v496
    %v503 = vadd.f32 %v405, 1.0
    %v504 = vlog2.pop %v503
    %v505 = vmul.f32 %v504, 0.6931472
    %v506 = vmul.f32 -0.5, %v405
    %v507 = vadd.f32 %v506, 1.0
    %v508 = vmul.f32 %v507, %v405
    %v509 = vand.u32 2147483647, %v405
    %vm510 = vcmp.lt.f32.partialorder %v509, 0.0004427343
    %v511 = vsel %vm510, %v508, %v505
    %v512 = vadd.f32 %v412, 1.0
    %v513 = vlog2.pop %v512
    %v514 = vmul.f32 %v513, 0.6931472
    %v515 = vmul.f32 -0.5, %v412
    %v516 = vadd.f32 %v515, 1.0
    %v517 = vmul.f32 %v516, %v412
    %v518 = vand.u32 2147483647, %v412
    %vm519 = vcmp.lt.f32.partialorder %v518, 0.0004427343
    %v520 = vsel %vm519, %v517, %v514
    %vm533 = vcmask 1041409
    %v534 = vsel %vm533, %v439, %v421
    %vm535 = vcmask 1042434
    %v536 = vsel %vm535, %v457, %v534
    %vm537 = vcmask 1043459
    %v538 = vsel %vm537, %v475, %v536
    %vm539 = vcmask 1044484
    %v540 = vsel %vm539, %v493, %v538
    %vm541 = vcmask 1045509
    %v542 = vsel %vm541, %v511, %v540
    %v543 = vsel %vm533, %v448, %v430
    %v544 = vsel %vm535, %v466, %v543
    %v545 = vsel %vm537, %v484, %v544
    %v546 = vsel %vm539, %v502, %v545
    %v547 = vsel %vm541, %v520, %v546
    %550 = vst [vmem:[#allocation2] sm:$0x3f] %v542
    %551 = vst [vmem:[#allocation2 + $0x8] sm:$0x3f] %v547
    // Predicated region
    $region18: #{tpu_custom_call.1} parent=1 // pred_check
      _
    $region19: #{tpu_custom_call.1} parent=1 // pred_check_branch
      %553 = sbr.rel (0) target = $region21
    $region20: #{tpu_custom_call.1} parent=1 // pred_region
      %s555 = ssub.s32 256, 256
      %556 = vsyncadd [#allocation3], %s555
      %s558 = sshll.u32 [#allocation2], 4
      %s559 = int_to_ptr.vmem [resolvable:$true] %s558
      %561 = dma.vmem_to_hbm [thread:$0]  %s559, 256, %s4, [#allocation3]
    $region21: #{tpu_custom_call.1} parent=1 // pred_fallthru
      _
    // Predicated region
    $region22: #{tpu_custom_call.1} parent=1 // pred_check
      _
    $region23: #{tpu_custom_call.1} parent=1 // pred_check_branch
      %563 = sbr.rel (0) target = $region25
    $region24: #{tpu_custom_call.1} parent=1 // pred_region
      %564 = dma.done [#allocation3], 256
    $region25: #{tpu_custom_call.1} parent=1 // pred_fallthru
      _
    %565 = vsyncpa [#allocation3], 1

</llo_original>
